<compile_context>
chip_gen: v7x
topology: tpu7x:2x2x1
jax: 0.10.0
libtpu: 0.0.40
codegen_flags: <defaults>
</compile_context>

<pallas_src>
import math

import jax
import jax.numpy as jnp
from jax.experimental import pallas as pl
from jax.experimental.pallas import tpu as pltpu


def _round_up(v, m):
    return ((v + m - 1) // m) * m


def _make_kernel(TS, n_per_split, S, has_mask, needs_edge_mask):
    """Kernel factory. Closes over static config; returns the Pallas body."""
    NEG = -1.0e4  # sigmoid/softplus/BCE of this logit are exactly 0 in f32

    def kernel(*refs):
        if has_mask:
            (x_ref, y_ref, m_ref,
             inter_ref, spred_ref, sgt_ref, bce_ref, msum_ref) = refs
        else:
            x_ref, y_ref, inter_ref, spred_ref, sgt_ref, bce_ref = refs
            m_ref = msum_ref = None

        j = pl.program_id(2)  # spatial (reduction) axis, innermost

        @pl.when(j == 0)
        def _init():
            inter_ref[...] = jnp.zeros_like(inter_ref)
            spred_ref[...] = jnp.zeros_like(spred_ref)
            sgt_ref[...] = jnp.zeros_like(sgt_ref)
            bce_ref[...] = jnp.zeros_like(bce_ref)
            if has_mask:
                msum_ref[...] = jnp.zeros_like(msum_ref)

        # Cast in vregs; inputs are streamed in their native dtype.
        x = x_ref[...].astype(jnp.float32)          # (C, TS)
        y = y_ref[...].astype(jnp.float32)          # (C, TS)
        if has_mask:
            m = m_ref[...].astype(jnp.float32)      # (1, TS)

        if needs_edge_mask:
            # Out-of-range lanes (partial last tile / clamped overshoot tiles)
            # are sanitized so that every contribution is exactly zero.
            col0 = (pl.program_id(0) * n_per_split + j) * TS
            lanes = jax.lax.broadcasted_iota(jnp.int32, x.shape, 1)
            valid = (lanes + col0) < S
            x = jnp.where(valid, x, NEG)
            y = jnp.where(valid, y, 0.0)
            if has_mask:
                m = jnp.where(valid[:1], m, 0.0)

        # One EUP exp shared between sigmoid and the BCE softplus term.
        e = jnp.exp(-jnp.abs(x))
        inv = pl.reciprocal(1.0 + e)                # exact; approx=True if EUP-bound
        p = jnp.where(x >= 0.0, inv, e * inv)       # sigmoid(x)
        # BCEWithLogitsLoss elementwise: max(x,0) - x*y + log1p(exp(-|x|))
        bce = jnp.maximum(x, 0.0) - x * y + jnp.log1p(e)

        if has_mask:
            inter_ref[...] += jnp.sum(p * y * m, axis=-1, keepdims=True)
            spred_ref[...] += jnp.sum(p * m, axis=-1, keepdims=True)
            sgt_ref[...] += jnp.sum(y * m, axis=-1, keepdims=True)
            bce_ref[...] += jnp.sum(bce * m, axis=-1, keepdims=True)
            msum_ref[...] += jnp.sum(m, axis=-1, keepdims=True)
        else:
            inter_ref[...] += jnp.sum(p * y, axis=-1, keepdims=True)
            spred_ref[...] += jnp.sum(p, axis=-1, keepdims=True)
            sgt_ref[...] += jnp.sum(y, axis=-1, keepdims=True)
            bce_ref[...] += jnp.sum(bce, axis=-1, keepdims=True)

    return kernel


def _row_reductions(x3, y3, mask3=None):
    """Single streaming pass over (B, C, S) producing per-(split, b, c) partial
    sums: intersect, sum_pred, sum_gt, bce_sum (+ mask_sum if masked)."""
    B, C, S = x3.shape
    has_mask = mask3 is not None

    # --- spatial tile: as large as the input double-buffer budget allows ---
    bytes_per_col = C * (x3.dtype.itemsize + y3.dtype.itemsize)
    if has_mask:
        bytes_per_col += mask3.dtype.itemsize
    budget = 16 * 1024 * 1024                      # input double-buffers
    ts_budget = (budget // (2 * bytes_per_col)) // 128 * 128
    if S < 128:
        TS = S                                      # full-dim block (allowed)
    else:
        TS = max(128, min(ts_budget, (S // 128) * 128))

    n_tiles = -(-S // TS)
    NSPLIT = 2 if n_tiles >= 2 else 1              # megacore-parallel split (v7x)
    n_per_split = -(-n_tiles // NSPLIT)
    needs_edge_mask = (S % TS != 0) or (NSPLIT * n_per_split != n_tiles)
    last_tile = n_tiles - 1

    def sp(s, j):
        t = s * n_per_split + j
        return jnp.minimum(t, last_tile) if needs_edge_mask else t

    x_spec = pl.BlockSpec((None, C, TS), lambda s, b, j: (b, 0, sp(s, j)))
    y_spec = pl.BlockSpec((None, C, TS), lambda s, b, j: (b, 0, sp(s, j)))
    in_specs = [x_spec, y_spec]
    inputs = [x3, y3]
    if has_mask:
        in_specs.append(
            pl.BlockSpec((None, 1, TS), lambda s, b, j: (b, 0, sp(s, j))))
        inputs.append(mask3)

    out_spec = pl.BlockSpec((None, None, C, 1), lambda s, b, j: (s, b, 0, 0))
    out_sds = jax.ShapeDtypeStruct((NSPLIT, B, C, 1), jnp.float32)
    out_specs = [out_spec] * 4
    out_shapes = [out_sds] * 4
    if has_mask:
        out_specs.append(
            pl.BlockSpec((None, None, 1, 1), lambda s, b, j: (s, b, 0, 0)))
        out_shapes.append(jax.ShapeDtypeStruct((NSPLIT, B, 1, 1), jnp.float32))

    kernel = _make_kernel(TS, n_per_split, S, has_mask, needs_edge_mask)

    return pl.pallas_call(
        kernel,
        out_shape=tuple(out_shapes),
        grid_spec=pltpu.PrefetchScalarGridSpec(
            num_scalar_prefetch=0,
            grid=(NSPLIT, B, n_per_split),
            in_specs=in_specs,
            out_specs=out_specs,
        ),
        compiler_params=pltpu.CompilerParams(
            dimension_semantics=("parallel", "parallel", "arbitrary"),
            vmem_limit_bytes=32 * 1024 * 1024,
        ),
    )(*inputs)


def dc_and_bce_loss(net_output, target, *,
                    weight_ce=1.0, weight_dice=1.0,
                    use_ignore_label=False,
                    batch_dice=True, smooth=1e-5):
    """Forward pass of DC_and_BCE_loss (scalar loss)."""
    B, C = net_output.shape[0], net_output.shape[1]
    S = math.prod(net_output.shape[2:])

    if target.dtype == jnp.bool_:
        target = target.astype(jnp.bfloat16)   # 0/1 exact, keeps HBM stream narrow

    x3 = net_output.reshape(B, C, S)

    if use_ignore_label:
        # IMPORTANT: ignore label lives in target[:, -1]. Stream the mask
        # per-batch, never broadcast over channels in HBM.
        mask3 = (1 - target[:, -1]).reshape(B, 1, S)
        y3 = target[:, :-1].reshape(B, C, S)
        inter, spred, sgt, bcesum, msum = _row_reductions(x3, y3, mask3)
    else:
        y3 = target.reshape(B, C, S)
        inter, spred, sgt, bcesum = _row_reductions(x3, y3)
        msum = None

    # Combine the two megacore splits; f32 accumulation (order differs slightly
    # from the torch reference for very large spatial extents).
    inter = inter.sum(axis=0)[..., 0]   # (B, C)
    spred = spred.sum(axis=0)[..., 0]
    sgt = sgt.sum(axis=0)[..., 0]
    bce_total = jnp.sum(bcesum)

    # MemoryEfficientSoftDiceLoss (do_bg=True, ddp=False)
    if batch_dice:
        inter = inter.sum(0)
        spred = spred.sum(0)
        sgt = sgt.sum(0)
    dc = (2.0 * inter + smooth) / jnp.clip(sgt + spred + smooth, 1e-8)
    dc_loss = -jnp.mean(dc)

    # BCEWithLogitsLoss
    if use_ignore_label:
        ce_loss = bce_total / jnp.clip(jnp.sum(msum), 1e-8)
    else:
        ce_loss = bce_total / (B * C * S)            # reduction='mean'

    return weight_ce * ce_loss + weight_dice * dc_loss


def _reference_loss(net_output, target, *, weight_ce=1.0, weight_dice=1.0,
                    use_ignore_label=False, batch_dice=True, smooth=1e-5):
    """Pure-JAX reference mirroring the PyTorch forward (for verification)."""
    x = net_output.astype(jnp.float32)
    t = target.astype(jnp.float32)
    if use_ignore_label:
        mask = 1.0 - t[:, -1:]
        y = t[:, :-1]
    else:
        mask = None
        y = t
    p = jax.nn.sigmoid(x)
    axes = tuple(range(2, x.ndim))
    if mask is None:
        inter = jnp.sum(p * y, axes)
        spred = jnp.sum(p, axes)
        sgt = jnp.sum(y, axes)
    else:
        inter = jnp.sum(p * y * mask, axes)
        spred = jnp.sum(p * mask, axes)
        sgt = jnp.sum(y * mask, axes)
    if batch_dice:
        inter, spred, sgt = inter.sum(0), spred.sum(0), sgt.sum(0)
    dc = (2.0 * inter + smooth) / jnp.clip(sgt + spred + smooth, 1e-8)
    dc_loss = -jnp.mean(dc)
    bce = jnp.maximum(x, 0.0) - x * y + jnp.log1p(jnp.exp(-jnp.abs(x)))
    if mask is None:
        ce = jnp.mean(bce)
    else:
        ce = jnp.sum(bce * mask) / jnp.clip(jnp.sum(mask), 1e-8)
    return weight_ce * ce + weight_dice * dc_loss


if __name__ == "__main__":
    key = jax.random.PRNGKey(0)
    k1, k2, k3, k4 = jax.random.split(key, 4)

    B, C, H, W = 2, 4, 16, 16

    # --- case 1: use_ignore_label=False; bf16 one-hot target streamed natively
    logits = jax.random.normal(k1, (B, C, H, W), dtype=jnp.float32)
    target = (jax.random.uniform(k2, (B, C, H, W)) > 0.5).astype(jnp.bfloat16)

    out = dc_and_bce_loss(logits, target, use_ignore_label=False)
    out = jax.block_until_ready(out)
    ref = _reference_loss(logits, target, use_ignore_label=False)
    assert jnp.allclose(out, ref, rtol=1e-4, atol=1e-5), (out, ref)

    # --- case 2: use_ignore_label=True (ignore channel is target[:, -1]) ---
    logits2 = jax.random.normal(k3, (B, C, H, W), dtype=jnp.float32)
    target2 = (jax.random.uniform(k4, (B, C + 1, H, W)) > 0.5).astype(jnp.bfloat16)

    out2 = dc_and_bce_loss(logits2, target2, use_ignore_label=True)
    out2 = jax.block_until_ready(out2)
    ref2 = _reference_loss(logits2, target2, use_ignore_label=True)
    assert jnp.allclose(out2, ref2, rtol=1e-4, atol=1e-5), (out2, ref2)

    # --- case 3: spatial extent not a multiple of 128 (exercises edge mask) ---
    H3, W3 = 15, 17
    logits3 = jax.random.normal(k1, (B, C, H3, W3), dtype=jnp.float32)
    target3 = (jax.random.uniform(k2, (B, C, H3, W3)) > 0.5).astype(jnp.bfloat16)
    out3 = jax.block_until_ready(dc_and_bce_loss(logits3, target3))
    ref3 = _reference_loss(logits3, target3)
    assert jnp.allclose(out3, ref3, rtol=1e-4, atol=1e-5), (out3, ref3)

    print("KERNEL_OK")
</pallas_src>

<mosaic_0001>
module attributes {stable_mosaic.version = 11 : i64} {
  func.func @kernel(%arg0: i32, %arg1: i32, %arg2: i32, %arg3: memref<1x4x256xf32, #tpu.memory_space<vmem>>, %arg4: memref<1x4x256xbf16, #tpu.memory_space<vmem>>, %arg5: memref<1x1x4x1xf32, #tpu.memory_space<vmem>>, %arg6: memref<1x1x4x1xf32, #tpu.memory_space<vmem>>, %arg7: memref<1x1x4x1xf32, #tpu.memory_space<vmem>>, %arg8: memref<1x1x4x1xf32, #tpu.memory_space<vmem>>) attributes {dimension_semantics = [#tpu.dimension_semantics<parallel>, #tpu.dimension_semantics<parallel>, #tpu.dimension_semantics<arbitrary>], iteration_bounds = array<i64: 1, 2, 1>, scalar_prefetch = 0 : i64, scratch_operands = 0 : i64, tpu.core_type = #tpu.core_type<tc>, window_params = [{transform_indices = @transform_0, window_bounds = array<i64: 1, 4, 256>}, {transform_indices = @transform_1, window_bounds = array<i64: 1, 4, 256>}, {transform_indices = @transform_2, window_bounds = array<i64: 1, 1, 4, 1>}, {transform_indices = @transform_3, window_bounds = array<i64: 1, 1, 4, 1>}, {transform_indices = @transform_4, window_bounds = array<i64: 1, 1, 4, 1>}, {transform_indices = @transform_5, window_bounds = array<i64: 1, 1, 4, 1>}]} {
    %c0_i32 = arith.constant 0 : i32
    %0 = arith.cmpi eq, %arg2, %c0_i32 : i32
    %1 = arith.extui %0 : i1 to i32
    %c0_i32_0 = arith.constant 0 : i32
    %2 = arith.cmpi ne, %1, %c0_i32_0 : i32
    scf.if %2 {
      %cst_45 = arith.constant 0.000000e+00 : f32
      %58 = vector.broadcast %cst_45 : f32 to vector<4x1xf32>
      %c0_46 = arith.constant 0 : index
      %c0_47 = arith.constant 0 : index
      %c0_48 = arith.constant 0 : index
      %c0_49 = arith.constant 0 : index
      %59 = vector.load %arg5[%c0_46, %c0_47, %c0_48, %c0_49] : memref<1x1x4x1xf32, #tpu.memory_space<vmem>>, vector<1x1x4x1xf32>
      %60 = vector.shape_cast %59 : vector<1x1x4x1xf32> to vector<4x1xf32>
      %61 = vector.shape_cast %58 : vector<4x1xf32> to vector<1x1x4x1xf32>
      tpu.vector_store %arg5[%c0_46, %c0_47, %c0_48, %c0_49], %61 {strides = array<i32>} : memref<1x1x4x1xf32, #tpu.memory_space<vmem>>, vector<1x1x4x1xf32>,
      %cst_50 = arith.constant 0.000000e+00 : f32
      %62 = vector.broadcast %cst_50 : f32 to vector<4x1xf32>
      %c0_51 = arith.constant 0 : index
      %c0_52 = arith.constant 0 : index
      %c0_53 = arith.constant 0 : index
      %c0_54 = arith.constant 0 : index
      %63 = vector.load %arg6[%c0_51, %c0_52, %c0_53, %c0_54] : memref<1x1x4x1xf32, #tpu.memory_space<vmem>>, vector<1x1x4x1xf32>
      %64 = vector.shape_cast %63 : vector<1x1x4x1xf32> to vector<4x1xf32>
      %65 = vector.shape_cast %62 : vector<4x1xf32> to vector<1x1x4x1xf32>
      tpu.vector_store %arg6[%c0_51, %c0_52, %c0_53, %c0_54], %65 {strides = array<i32>} : memref<1x1x4x1xf32, #tpu.memory_space<vmem>>, vector<1x1x4x1xf32>,
      %cst_55 = arith.constant 0.000000e+00 : f32
      %66 = vector.broadcast %cst_55 : f32 to vector<4x1xf32>
      %c0_56 = arith.constant 0 : index
      %c0_57 = arith.constant 0 : index
      %c0_58 = arith.constant 0 : index
      %c0_59 = arith.constant 0 : index
      %67 = vector.load %arg7[%c0_56, %c0_57, %c0_58, %c0_59] : memref<1x1x4x1xf32, #tpu.memory_space<vmem>>, vector<1x1x4x1xf32>
      %68 = vector.shape_cast %67 : vector<1x1x4x1xf32> to vector<4x1xf32>
      %69 = vector.shape_cast %66 : vector<4x1xf32> to vector<1x1x4x1xf32>
      tpu.vector_store %arg7[%c0_56, %c0_57, %c0_58, %c0_59], %69 {strides = array<i32>} : memref<1x1x4x1xf32, #tpu.memory_space<vmem>>, vector<1x1x4x1xf32>,
      %cst_60 = arith.constant 0.000000e+00 : f32
      %70 = vector.broadcast %cst_60 : f32 to vector<4x1xf32>
      %c0_61 = arith.constant 0 : index
      %c0_62 = arith.constant 0 : index
      %c0_63 = arith.constant 0 : index
      %c0_64 = arith.constant 0 : index
      %71 = vector.load %arg8[%c0_61, %c0_62, %c0_63, %c0_64] : memref<1x1x4x1xf32, #tpu.memory_space<vmem>>, vector<1x1x4x1xf32>
      %72 = vector.shape_cast %71 : vector<1x1x4x1xf32> to vector<4x1xf32>
      %73 = vector.shape_cast %70 : vector<4x1xf32> to vector<1x1x4x1xf32>
      tpu.vector_store %arg8[%c0_61, %c0_62, %c0_63, %c0_64], %73 {strides = array<i32>} : memref<1x1x4x1xf32, #tpu.memory_space<vmem>>, vector<1x1x4x1xf32>,
    } else {
    }
    %c0 = arith.constant 0 : index
    %c0_1 = arith.constant 0 : index
    %c0_2 = arith.constant 0 : index
    %3 = vector.load %arg3[%c0, %c0_1, %c0_2] : memref<1x4x256xf32, #tpu.memory_space<vmem>>, vector<1x4x256xf32>
    %4 = vector.shape_cast %3 : vector<1x4x256xf32> to vector<4x256xf32>
    %c0_3 = arith.constant 0 : index
    %c0_4 = arith.constant 0 : index
    %c0_5 = arith.constant 0 : index
    %5 = vector.load %arg4[%c0_3, %c0_4, %c0_5] : memref<1x4x256xbf16, #tpu.memory_space<vmem>>, vector<1x4x256xbf16>
    %6 = vector.shape_cast %5 : vector<1x4x256xbf16> to vector<4x256xbf16>
    %7 = arith.extf %6 : vector<4x256xbf16> to vector<4x256xf32>
    %8 = math.absf %4 : vector<4x256xf32>
    %cst = arith.constant 0.000000e+00 : f32
    %9 = vector.broadcast %cst : f32 to vector<4x256xf32>
    %10 = arith.subf %9, %8 : vector<4x256xf32>
    %11 = math.exp %10 : vector<4x256xf32>
    %cst_6 = arith.constant 1.000000e+00 : f32
    %12 = vector.broadcast %cst_6 : f32 to vector<4x256xf32>
    %13 = arith.addf %12, %11 : vector<4x256xf32>
    %14 = tpu.reciprocal %13 : vector<4x256xf32> -> vector<4x256xf32>
    %cst_7 = arith.constant 0.000000e+00 : f32
    %15 = vector.broadcast %cst_7 : f32 to vector<4x256xf32>
    %16 = arith.cmpf oge, %4, %15 : vector<4x256xf32>
    %17 = arith.mulf %11, %14 : vector<4x256xf32>
    %18 = arith.select %16, %14, %17 : vector<4x256xi1>, vector<4x256xf32>
    %cst_8 = arith.constant 0.000000e+00 : f32
    %19 = vector.broadcast %cst_8 : f32 to vector<4x256xf32>
    %20 = arith.maximumf %4, %19 : vector<4x256xf32>
    %21 = arith.mulf %4, %7 : vector<4x256xf32>
    %22 = arith.subf %20, %21 : vector<4x256xf32>
    %23 = math.log1p %11 : vector<4x256xf32>
    %24 = arith.addf %22, %23 : vector<4x256xf32>
    %c0_9 = arith.constant 0 : index
    %c0_10 = arith.constant 0 : index
    %c0_11 = arith.constant 0 : index
    %c0_12 = arith.constant 0 : index
    %25 = vector.load %arg5[%c0_9, %c0_10, %c0_11, %c0_12] : memref<1x1x4x1xf32, #tpu.memory_space<vmem>>, vector<1x1x4x1xf32>
    %26 = vector.shape_cast %25 : vector<1x1x4x1xf32> to vector<4x1xf32>
    %27 = arith.mulf %18, %7 : vector<4x256xf32>
    %cst_13 = arith.constant dense<0.000000e+00> : vector<4xf32>
    %28 = vector.multi_reduction <add>, %27, %cst_13 [1] : vector<4x256xf32> to vector<4xf32>
    %29 = vector.shape_cast %28 : vector<4xf32> to vector<4x1xf32>
    %30 = arith.addf %26, %29 : vector<4x1xf32>
    %c0_14 = arith.constant 0 : index
    %c0_15 = arith.constant 0 : index
    %c0_16 = arith.constant 0 : index
    %c0_17 = arith.constant 0 : index
    %31 = vector.load %arg5[%c0_14, %c0_15, %c0_16, %c0_17] : memref<1x1x4x1xf32, #tpu.memory_space<vmem>>, vector<1x1x4x1xf32>
    %32 = vector.shape_cast %31 : vector<1x1x4x1xf32> to vector<4x1xf32>
    %33 = vector.shape_cast %30 : vector<4x1xf32> to vector<1x1x4x1xf32>
    tpu.vector_store %arg5[%c0_14, %c0_15, %c0_16, %c0_17], %33 {strides = array<i32>} : memref<1x1x4x1xf32, #tpu.memory_space<vmem>>, vector<1x1x4x1xf32>,
    %c0_18 = arith.constant 0 : index
    %c0_19 = arith.constant 0 : index
    %c0_20 = arith.constant 0 : index
    %c0_21 = arith.constant 0 : index
    %34 = vector.load %arg6[%c0_18, %c0_19, %c0_20, %c0_21] : memref<1x1x4x1xf32, #tpu.memory_space<vmem>>, vector<1x1x4x1xf32>
    %35 = vector.shape_cast %34 : vector<1x1x4x1xf32> to vector<4x1xf32>
    %cst_22 = arith.constant dense<0.000000e+00> : vector<4xf32>
    %36 = vector.multi_reduction <add>, %18, %cst_22 [1] : vector<4x256xf32> to vector<4xf32>
    %37 = vector.shape_cast %36 : vector<4xf32> to vector<4x1xf32>
    %38 = arith.addf %35, %37 : vector<4x1xf32>
    %c0_23 = arith.constant 0 : index
    %c0_24 = arith.constant 0 : index
    %c0_25 = arith.constant 0 : index
    %c0_26 = arith.constant 0 : index
    %39 = vector.load %arg6[%c0_23, %c0_24, %c0_25, %c0_26] : memref<1x1x4x1xf32, #tpu.memory_space<vmem>>, vector<1x1x4x1xf32>
    %40 = vector.shape_cast %39 : vector<1x1x4x1xf32> to vector<4x1xf32>
    %41 = vector.shape_cast %38 : vector<4x1xf32> to vector<1x1x4x1xf32>
    tpu.vector_store %arg6[%c0_23, %c0_24, %c0_25, %c0_26], %41 {strides = array<i32>} : memref<1x1x4x1xf32, #tpu.memory_space<vmem>>, vector<1x1x4x1xf32>,
    %c0_27 = arith.constant 0 : index
    %c0_28 = arith.constant 0 : index
    %c0_29 = arith.constant 0 : index
    %c0_30 = arith.constant 0 : index
    %42 = vector.load %arg7[%c0_27, %c0_28, %c0_29, %c0_30] : memref<1x1x4x1xf32, #tpu.memory_space<vmem>>, vector<1x1x4x1xf32>
    %43 = vector.shape_cast %42 : vector<1x1x4x1xf32> to vector<4x1xf32>
    %cst_31 = arith.constant dense<0.000000e+00> : vector<4xf32>
    %44 = vector.multi_reduction <add>, %7, %cst_31 [1] : vector<4x256xf32> to vector<4xf32>
    %45 = vector.shape_cast %44 : vector<4xf32> to vector<4x1xf32>
    %46 = arith.addf %43, %45 : vector<4x1xf32>
    %c0_32 = arith.constant 0 : index
    %c0_33 = arith.constant 0 : index
    %c0_34 = arith.constant 0 : index
    %c0_35 = arith.constant 0 : index
    %47 = vector.load %arg7[%c0_32, %c0_33, %c0_34, %c0_35] : memref<1x1x4x1xf32, #tpu.memory_space<vmem>>, vector<1x1x4x1xf32>
    %48 = vector.shape_cast %47 : vector<1x1x4x1xf32> to vector<4x1xf32>
    %49 = vector.shape_cast %46 : vector<4x1xf32> to vector<1x1x4x1xf32>
    tpu.vector_store %arg7[%c0_32, %c0_33, %c0_34, %c0_35], %49 {strides = array<i32>} : memref<1x1x4x1xf32, #tpu.memory_space<vmem>>, vector<1x1x4x1xf32>,
    %c0_36 = arith.constant 0 : index
    %c0_37 = arith.constant 0 : index
    %c0_38 = arith.constant 0 : index
    %c0_39 = arith.constant 0 : index
    %50 = vector.load %arg8[%c0_36, %c0_37, %c0_38, %c0_39] : memref<1x1x4x1xf32, #tpu.memory_space<vmem>>, vector<1x1x4x1xf32>
    %51 = vector.shape_cast %50 : vector<1x1x4x1xf32> to vector<4x1xf32>
    %cst_40 = arith.constant dense<0.000000e+00> : vector<4xf32>
    %52 = vector.multi_reduction <add>, %24, %cst_40 [1] : vector<4x256xf32> to vector<4xf32>
    %53 = vector.shape_cast %52 : vector<4xf32> to vector<4x1xf32>
    %54 = arith.addf %51, %53 : vector<4x1xf32>
    %c0_41 = arith.constant 0 : index
    %c0_42 = arith.constant 0 : index
    %c0_43 = arith.constant 0 : index
    %c0_44 = arith.constant 0 : index
    %55 = vector.load %arg8[%c0_41, %c0_42, %c0_43, %c0_44] : memref<1x1x4x1xf32, #tpu.memory_space<vmem>>, vector<1x1x4x1xf32>
    %56 = vector.shape_cast %55 : vector<1x1x4x1xf32> to vector<4x1xf32>
    %57 = vector.shape_cast %54 : vector<4x1xf32> to vector<1x1x4x1xf32>
    tpu.vector_store %arg8[%c0_41, %c0_42, %c0_43, %c0_44], %57 {strides = array<i32>} : memref<1x1x4x1xf32, #tpu.memory_space<vmem>>, vector<1x1x4x1xf32>,
    return
  }
  func.func @transform_0(%arg0: i32, %arg1: i32, %arg2: i32) -> (i32, i32, i32) {
    %c1_i32 = arith.constant 1 : i32
    %0 = arith.muli %arg0, %c1_i32 : i32
    %1 = arith.addi %0, %arg2 : i32
    %c0_i32 = arith.constant 0 : i32
    %c0_i32_0 = arith.constant 0 : i32
    return %arg1, %c0_i32, %1 : i32, i32, i32
  }
  func.func @transform_1(%arg0: i32, %arg1: i32, %arg2: i32) -> (i32, i32, i32) {
    %c1_i32 = arith.constant 1 : i32
    %0 = arith.muli %arg0, %c1_i32 : i32
    %1 = arith.addi %0, %arg2 : i32
    %c0_i32 = arith.constant 0 : i32
    %c0_i32_0 = arith.constant 0 : i32
    return %arg1, %c0_i32, %1 : i32, i32, i32
  }
  func.func @transform_2(%arg0: i32, %arg1: i32, %arg2: i32) -> (i32, i32, i32, i32) {
    %c0_i32 = arith.constant 0 : i32
    %c0_i32_0 = arith.constant 0 : i32
    %c0_i32_1 = arith.constant 0 : i32
    return %arg0, %arg1, %c0_i32, %c0_i32_0 : i32, i32, i32, i32
  }
  func.func @transform_3(%arg0: i32, %arg1: i32, %arg2: i32) -> (i32, i32, i32, i32) {
    %c0_i32 = arith.constant 0 : i32
    %c0_i32_0 = arith.constant 0 : i32
    %c0_i32_1 = arith.constant 0 : i32
    return %arg0, %arg1, %c0_i32, %c0_i32_0 : i32, i32, i32, i32
  }
  func.func @transform_4(%arg0: i32, %arg1: i32, %arg2: i32) -> (i32, i32, i32, i32) {
    %c0_i32 = arith.constant 0 : i32
    %c0_i32_0 = arith.constant 0 : i32
    %c0_i32_1 = arith.constant 0 : i32
    return %arg0, %arg1, %c0_i32, %c0_i32_0 : i32, i32, i32, i32
  }
  func.func @transform_5(%arg0: i32, %arg1: i32, %arg2: i32) -> (i32, i32, i32, i32) {
    %c0_i32 = arith.constant 0 : i32
    %c0_i32_0 = arith.constant 0 : i32
    %c0_i32_1 = arith.constant 0 : i32
    return %arg0, %arg1, %c0_i32, %c0_i32_0 : i32, i32, i32, i32
  }
}

</mosaic_0001>

<llo_original>
// kernel: tpu_custom_call.1
$region0: #{tpu_custom_call.1}
  #allocation0 [shape = 'u32[]', space=smem, size = 0x4, offset = 0x4, fixed_abs, tag = 'smem constant byte address 0x4 - core index']
  #allocation1 [shape = 'u32[144,128]{1,0:T(1,128)}', space=vmem, size = 0x12000, scoped, tag = 'internal scratch']
  %s0 = inlined_call_operand.hbm [shape: f32[2,4,256], index: 0, kind: input, shape index: {}]
  %s1 = inlined_call_operand.hbm [shape: bf16[2,4,256], index: 1, kind: input, shape index: {}]
  %s2 = inlined_call_operand.vmem [shape: f32[1,2,4,1], index: 2, kind: output, shape index: {0}]
  %s3 = inlined_call_operand.vmem [shape: f32[1,2,4,1], index: 3, kind: output, shape index: {1}]
  %s4 = inlined_call_operand.vmem [shape: f32[1,2,4,1], index: 4, kind: output, shape index: {2}]
  %s5 = inlined_call_operand.vmem [shape: f32[1,2,4,1], index: 5, kind: output, shape index: {3}]
  %6 = xla_tuple %s2, %s3, %s4, %s5
  %s7 = sld [smem:[#allocation0]]
  $region77: #{tpu_custom_call.1} parent=0
    _
  %s9 = ssub.s32 1, %s7
  %s10 = scalar_select 0, %s9, %s7
  $region1: #{tpu_custom_call.1} parent=0
    #allocation2 [shape = 'u8[8192]{0}', space=vmem, size = 0x2000, scoped, tag = 'input window, operand 0']
    #allocation3 [shape = 's32[2]{0}', space=sflag, size = 0x8, scoped, tag = 'scoped memory for tpu_custom_call.1']
    #allocation4 [shape = 'u8[4096]{0}', space=vmem, size = 0x1000, scoped, tag = 'input window, operand 1']
    #allocation5 [shape = 's32[2]{0}', space=sflag, size = 0x8, scoped, tag = 'scoped memory for tpu_custom_call.1']
    %11 = vsyncpa [#allocation3], 0
    %s12 = scalar_lea.sflag [#allocation3], 1
    %13 = vsyncpa %s12, 0
    %14 = vsyncpa [#allocation5], 0
    %s15 = scalar_lea.sflag [#allocation5], 1
    %16 = vsyncpa %s15, 0
    loop: start=0, step=1, limit=4
    $region2: #{tpu_custom_call.1} parent=1 // loop_pre_header
      _
    $region3: #{tpu_custom_call.1} parent=1 // loop_header
      %s18 = sphi 0, %s22
      %p19 = scmp.ge.s32.totalorder %s18, 4
      %s25 = sphi 0, %s44
      %s26 = sphi 0, %s40
      %s27 = sphi 0, %s36
      %s28 = sphi 0, %s25
      %s29 = sphi 0, %s26
      %s30 = sphi 0, %s27
      %s31 = sphi 0, %s28
      %s32 = sphi 0, %s29
      %s33 = sphi 0, %s30
      %s51 = sphi 0, %s53
      %s54 = sphi 0, %s51
      %s55 = sphi 0, %s54
      %s71 = sphi 0, %s55
      %s81 = sphi 0, %s83
      %s84 = sphi 0, %s81
      %s85 = sphi 0, %s84
      %s101 = sphi 0, %s85
      %s109 = sphi 0, %s111
      %s112 = sphi 0, %s109
      %s113 = sphi 0, %s112
      %s129 = sphi 0, %s113
      %s137 = sphi 0, %s139
      %s140 = sphi 0, %s137
      %s141 = sphi 0, %s140
      %s157 = sphi 0, %s141
      %s165 = sphi 0, %s167
      %s168 = sphi 0, %s165
      %s169 = sphi 0, %s168
      %s185 = sphi 0, %s169
      %s193 = sphi 0, %s195
      %s196 = sphi 0, %s193
      %s197 = sphi 0, %s196
      %s213 = sphi 0, %s197
    $region4: #{tpu_custom_call.1} parent=1 // loop_header_branch
      %21 = sbr.rel (%p19) target = $region8
    $region5: #{tpu_custom_call.1} parent=1 // loop_body
      %s23 = ssub.s32 %s18, 1
      %s24 = ssub.s32 %s18, 2
      %s34 = sadd.s32 1, %s27
      %p35 = scmp.ge.s32.totalorder %s34, 1
      %s36 = scalar_select %p35, 0, %s34
      %s37 = sadd.s32 1, %s26
      %s38 = scalar_select %p35, %s37, %s26
      %p39 = scmp.ge.s32.totalorder %s38, 2
      %s40 = scalar_select %p39, 0, %s38
      %s41 = sadd.s32 1, %s25
      %s42 = scalar_select %p39, %s41, %s25
      %p43 = scmp.ge.s32.totalorder %s42, 1
      %s44 = scalar_select %p43, 0, %s42
      %s45 = sadd.s32 %s25, %s27
      %s46 = sadd.s32 %s44, %s36
      %s47 = ssub.s32 %s26, %s40
      %s48 = ssub.s32 %s45, %s46
      %s49 = sor.u32 %s47, %s48
      %p50 = scmp.eq.s32.totalorder %s49, 0
      %s52 = sadd.s32 %s51, 1
      %s53 = scalar_select %p50, %s51, %s52
      %p56 = pneg %p50
      %p57 = scmp.eq.s32.totalorder %s18, 1
      %p58 = por %p56, %p57
      %p59 = scmp.ne.s32.totalorder %s51, %s54
      %p60 = scmp.eq.s32.totalorder %s18, 0
      %p61 = por %p59, %p60
      %p62 = scmp.ne.s32.totalorder %s51, %s54
      %p63 = scmp.eq.s32.totalorder %s23, 1
      %p64 = por %p62, %p63
      %p65 = scmp.ne.s32.totalorder %s54, %s55
      %p66 = scmp.eq.s32.totalorder %s23, 0
      %p67 = por %p65, %p66
      %p68 = scmp.ne.s32.totalorder %s54, %s55
      %p69 = scmp.eq.s32.totalorder %s24, 1
      %p70 = por %p68, %p69
      %p72 = scmp.ne.s32.totalorder %s55, %s71
      %p73 = scmp.eq.s32.totalorder %s24, 0
      %p74 = por %p72, %p73
      %s75 = sadd.s32 %s25, %s27
      %s76 = sadd.s32 %s44, %s36
      %s77 = ssub.s32 %s26, %s40
      %s78 = ssub.s32 %s75, %s76
      %s79 = sor.u32 %s77, %s78
      %p80 = scmp.eq.s32.totalorder %s79, 0
      %s82 = sadd.s32 %s81, 1
      %s83 = scalar_select %p80, %s81, %s82
      %p86 = pneg %p80
      %p87 = scmp.eq.s32.totalorder %s18, 1
      %p88 = por %p86, %p87
      %p89 = scmp.ne.s32.totalorder %s81, %s84
      %p90 = scmp.eq.s32.totalorder %s18, 0
      %p91 = por %p89, %p90
      %p92 = scmp.ne.s32.totalorder %s81, %s84
      %p93 = scmp.eq.s32.totalorder %s23, 1
      %p94 = por %p92, %p93
      %p95 = scmp.ne.s32.totalorder %s84, %s85
      %p96 = scmp.eq.s32.totalorder %s23, 0
      %p97 = por %p95, %p96
      %p98 = scmp.ne.s32.totalorder %s84, %s85
      %p99 = scmp.eq.s32.totalorder %s24, 1
      %p100 = por %p98, %p99
      %p102 = scmp.ne.s32.totalorder %s85, %s101
      %p103 = scmp.eq.s32.totalorder %s24, 0
      %p104 = por %p102, %p103
      %s105 = ssub.s32 %s25, %s44
      %s106 = ssub.s32 %s26, %s40
      %s107 = sor.u32 %s105, %s106
      %p108 = scmp.eq.s32.totalorder %s107, 0
      %s110 = sadd.s32 %s109, 1
      %s111 = scalar_select %p108, %s109, %s110
      %p114 = pneg %p108
      %p115 = scmp.eq.s32.totalorder %s18, 1
      %p116 = por %p114, %p115
      %p117 = scmp.ne.s32.totalorder %s109, %s112
      %p118 = scmp.eq.s32.totalorder %s18, 0
      %p119 = por %p117, %p118
      %p120 = scmp.ne.s32.totalorder %s109, %s112
      %p121 = scmp.eq.s32.totalorder %s23, 1
      %p122 = por %p120, %p121
      %p123 = scmp.ne.s32.totalorder %s112, %s113
      %p124 = scmp.eq.s32.totalorder %s23, 0
      %p125 = por %p123, %p124
      %p126 = scmp.ne.s32.totalorder %s112, %s113
      %p127 = scmp.eq.s32.totalorder %s24, 1
      %p128 = por %p126, %p127
      %p130 = scmp.ne.s32.totalorder %s113, %s129
      %p131 = scmp.eq.s32.totalorder %s24, 0
      %p132 = por %p130, %p131
      %s133 = ssub.s32 %s25, %s44
      %s134 = ssub.s32 %s26, %s40
      %s135 = sor.u32 %s133, %s134
      %p136 = scmp.eq.s32.totalorder %s135, 0
      %s138 = sadd.s32 %s137, 1
      %s139 = scalar_select %p136, %s137, %s138
      %p142 = pneg %p136
      %p143 = scmp.eq.s32.totalorder %s18, 1
      %p144 = por %p142, %p143
      %p145 = scmp.ne.s32.totalorder %s137, %s140
      %p146 = scmp.eq.s32.totalorder %s18, 0
      %p147 = por %p145, %p146
      %p148 = scmp.ne.s32.totalorder %s137, %s140
      %p149 = scmp.eq.s32.totalorder %s23, 1
      %p150 = por %p148, %p149
      %p151 = scmp.ne.s32.totalorder %s140, %s141
      %p152 = scmp.eq.s32.totalorder %s23, 0
      %p153 = por %p151, %p152
      %p154 = scmp.ne.s32.totalorder %s140, %s141
      %p155 = scmp.eq.s32.totalorder %s24, 1
      %p156 = por %p154, %p155
      %p158 = scmp.ne.s32.totalorder %s141, %s157
      %p159 = scmp.eq.s32.totalorder %s24, 0
      %p160 = por %p158, %p159
      %s161 = ssub.s32 %s25, %s44
      %s162 = ssub.s32 %s26, %s40
      %s163 = sor.u32 %s161, %s162
      %p164 = scmp.eq.s32.totalorder %s163, 0
      %s166 = sadd.s32 %s165, 1
      %s167 = scalar_select %p164, %s165, %s166
      %p170 = pneg %p164
      %p171 = scmp.eq.s32.totalorder %s18, 1
      %p172 = por %p170, %p171
      %p173 = scmp.ne.s32.totalorder %s165, %s168
      %p174 = scmp.eq.s32.totalorder %s18, 0
      %p175 = por %p173, %p174
      %p176 = scmp.ne.s32.totalorder %s165, %s168
      %p177 = scmp.eq.s32.totalorder %s23, 1
      %p178 = por %p176, %p177
      %p179 = scmp.ne.s32.totalorder %s168, %s169
      %p180 = scmp.eq.s32.totalorder %s23, 0
      %p181 = por %p179, %p180
      %p182 = scmp.ne.s32.totalorder %s168, %s169
      %p183 = scmp.eq.s32.totalorder %s24, 1
      %p184 = por %p182, %p183
      %p186 = scmp.ne.s32.totalorder %s169, %s185
      %p187 = scmp.eq.s32.totalorder %s24, 0
      %p188 = por %p186, %p187
      %s189 = ssub.s32 %s25, %s44
      %s190 = ssub.s32 %s26, %s40
      %s191 = sor.u32 %s189, %s190
      %p192 = scmp.eq.s32.totalorder %s191, 0
      %s194 = sadd.s32 %s193, 1
      %s195 = scalar_select %p192, %s193, %s194
      %p198 = pneg %p192
      %p199 = scmp.eq.s32.totalorder %s18, 1
      %p200 = por %p198, %p199
      %p201 = scmp.ne.s32.totalorder %s193, %s196
      %p202 = scmp.eq.s32.totalorder %s18, 0
      %p203 = por %p201, %p202
      %p204 = scmp.ne.s32.totalorder %s193, %s196
      %p205 = scmp.eq.s32.totalorder %s23, 1
      %p206 = por %p204, %p205
      %p207 = scmp.ne.s32.totalorder %s196, %s197
      %p208 = scmp.eq.s32.totalorder %s23, 0
      %p209 = por %p207, %p208
      %p210 = scmp.ne.s32.totalorder %s196, %s197
      %p211 = scmp.eq.s32.totalorder %s24, 1
      %p212 = por %p210, %p211
      %p214 = scmp.ne.s32.totalorder %s197, %s213
      %p215 = scmp.eq.s32.totalorder %s24, 0
      %p216 = por %p214, %p215
      %p217 = scmp.le.s32.totalorder 1, %s18
      %p218 = scmp.lt.s32.totalorder %s18, 3
      %p219 = pnand %p217, %p218
      %p220 = pneg %p219
      // Predicated region
      $region9: #{tpu_custom_call.1} parent=5 // pred_check
        _
      $region10: #{tpu_custom_call.1} parent=5 // pred_check_branch
        %222 = sbr.rel (%p219) target = $region12
      $region11: #{tpu_custom_call.1} parent=5 // pred_region
        %s223 = ssub.s32 %s18, 1
      $region12: #{tpu_custom_call.1} parent=5 // pred_fallthru
        _
      %p224 = scmp.lt.s32.totalorder %s18, 2
      // Predicated region
      $region13: #{tpu_custom_call.1} parent=5 // pred_check
        %p225 = pneg %p224
      $region14: #{tpu_custom_call.1} parent=5 // pred_check_branch
        %227 = sbr.rel (%p225) target = $region16
      $region15: #{tpu_custom_call.1} parent=5 // pred_region
        // Predicated region
        $region17: #{tpu_custom_call.1} parent=15 // pred_check
          %p228 = pneg %p61
        $region18: #{tpu_custom_call.1} parent=15 // pred_check_branch
          %230 = sbr.rel (%p228) target = $region20
        $region19: #{tpu_custom_call.1} parent=15 // pred_region
          %s231 = sand.u32 %s51, 1
          %s232 = scalar_lea.sflag [#allocation3], %s231
          %s233 = sand.u32 %s51, 1
          %s234 = smul.addr %s233, 8
          %s235 = scalar_lea.vmem [#allocation2], %s234
          %s236 = sadd.s32 %s25, %s27
          %s237 = smul.u32 2, %s236
          %s239 = ssub.s32 128, 128
          %240 = vsyncadd %s232, %s239
          %s241 = smul.addr %s26, 2
          %s242 = sadd.s32 %s237, %s241
          %s243 = smul.addr %s242, 64
          %s244 = scalar_lea.hbm %s0, %s243
          %s246 = sshll.u32 %s235, 4
          %s247 = int_to_ptr.vmem [resolvable:$true] %s246
          %249 = dma.hbm_to_vmem [thread:$0]  %s244, 128, %s247, %s232
        $region20: #{tpu_custom_call.1} parent=15 // pred_fallthru
          _
        // Predicated region
        $region21: #{tpu_custom_call.1} parent=15 // pred_check
          %p250 = pneg %p91
        $region22: #{tpu_custom_call.1} parent=15 // pred_check_branch
          %252 = sbr.rel (%p250) target = $region24
        $region23: #{tpu_custom_call.1} parent=15 // pred_region
          %s253 = sand.u32 %s81, 1
          %s254 = scalar_lea.sflag [#allocation5], %s253
          %s255 = sand.u32 %s81, 1
          %s256 = smul.addr %s255, 4
          %s257 = scalar_lea.vmem [#allocation4], %s256
          %s258 = sadd.s32 %s25, %s27
          %s259 = smul.u32 2, %s258
          %s261 = ssub.s32 64, 64
          %262 = vsyncadd %s254, %s261
          %s263 = smul.addr %s26, 2
          %s264 = sadd.s32 %s259, %s263
          %s265 = smul.addr %s264, 32
          %s266 = scalar_lea.hbm %s1, %s265
          %s268 = sshll.u32 %s257, 4
          %s269 = int_to_ptr.vmem [resolvable:$true] %s268
          %271 = dma.hbm_to_vmem [thread:$0]  %s266, 64, %s269, %s254
        $region24: #{tpu_custom_call.1} parent=15 // pred_fallthru
          _
      $region16: #{tpu_custom_call.1} parent=5 // pred_fallthru
        _
      %p272 = scmp.le.s32.totalorder 1, %s18
      %p273 = scmp.lt.s32.totalorder %s18, 3
      %p274 = pnand %p272, %p273
      %p275 = pneg %p274
      // Predicated region
      $region25: #{tpu_custom_call.1} parent=5 // pred_check
        _
      $region26: #{tpu_custom_call.1} parent=5 // pred_check_branch
        %277 = sbr.rel (%p274) target = $region28
      $region27: #{tpu_custom_call.1} parent=5 // pred_region
        %s278 = ssub.s32 %s18, 1
        %s279 = sand.u32 %s54, 1
        %s280 = scalar_lea.sflag [#allocation3], %s279
        %s281 = sand.u32 %s54, 1
        %s282 = smul.addr %s281, 8
        %s283 = scalar_lea.vmem [#allocation2], %s282
        // Predicated region
        $region29: #{tpu_custom_call.1} parent=27 // pred_check
          %p284 = pneg %p67
        $region30: #{tpu_custom_call.1} parent=27 // pred_check_branch
          %286 = sbr.rel (%p284) target = $region32
        $region31: #{tpu_custom_call.1} parent=27 // pred_region
          %287 = dma.done %s280, 128
        $region32: #{tpu_custom_call.1} parent=27 // pred_fallthru
          _
        %s288 = sand.u32 %s84, 1
        %s289 = scalar_lea.sflag [#allocation5], %s288
        %s290 = sand.u32 %s84, 1
        %s291 = smul.addr %s290, 4
        %s292 = scalar_lea.vmem [#allocation4], %s291
        // Predicated region
        $region33: #{tpu_custom_call.1} parent=27 // pred_check
          %p293 = pneg %p97
        $region34: #{tpu_custom_call.1} parent=27 // pred_check_branch
          %295 = sbr.rel (%p293) target = $region36
        $region35: #{tpu_custom_call.1} parent=27 // pred_region
          %296 = dma.done %s289, 64
        $region36: #{tpu_custom_call.1} parent=27 // pred_fallthru
          _
        %s297 = sand.u32 %s54, 1
        %s298 = scalar_lea.sflag [#allocation3], %s297
        %s299 = sand.u32 %s54, 1
        %s300 = smul.addr %s299, 8
        %s301 = scalar_lea.vmem [#allocation2], %s300
        %p302 = pneg %p67
        %p303 = pneg %p64
        %s304 = sand.u32 %s84, 1
        %s305 = scalar_lea.sflag [#allocation5], %s304
        %s306 = sand.u32 %s84, 1
        %s307 = smul.addr %s306, 4
        %s308 = scalar_lea.vmem [#allocation4], %s307
        %p309 = pneg %p97
        %p310 = pneg %p94
        %p311 = pneg %p125
        %p312 = pneg %p122
        %p313 = scmp.lt.s32.totalorder %s28, 0
        %s314 = scalar_select %p313, %s28, 0
        %p315 = scmp.lt.s32.totalorder %s29, 1
        %s316 = scalar_select %p315, %s29, 1
        %s317 = smul.addr %s314, 2
        %s318 = sadd.s32 %s316, %s317
        %s319 = smul.addr %s318, 4
        %s320 = scalar_lea.vmem %s2, %s319
        %p321 = pneg %p153
        %p322 = pneg %p150
        %p323 = scmp.lt.s32.totalorder %s28, 0
        %s324 = scalar_select %p323, %s28, 0
        %p325 = scmp.lt.s32.totalorder %s29, 1
        %s326 = scalar_select %p325, %s29, 1
        %s327 = smul.addr %s324, 2
        %s328 = sadd.s32 %s326, %s327
        %s329 = smul.addr %s328, 4
        %s330 = scalar_lea.vmem %s3, %s329
        %p331 = pneg %p181
        %p332 = pneg %p178
        %p333 = scmp.lt.s32.totalorder %s28, 0
        %s334 = scalar_select %p333, %s28, 0
        %p335 = scmp.lt.s32.totalorder %s29, 1
        %s336 = scalar_select %p335, %s29, 1
        %s337 = smul.addr %s334, 2
        %s338 = sadd.s32 %s336, %s337
        %s339 = smul.addr %s338, 4
        %s340 = scalar_lea.vmem %s4, %s339
        %p341 = pneg %p209
        %p342 = pneg %p206
        %p343 = scmp.lt.s32.totalorder %s28, 0
        %s344 = scalar_select %p343, %s28, 0
        %p345 = scmp.lt.s32.totalorder %s29, 1
        %s346 = scalar_select %p345, %s29, 1
        %s347 = smul.addr %s344, 2
        %s348 = sadd.s32 %s346, %s347
        %s349 = smul.addr %s348, 4
        %s350 = scalar_lea.vmem %s5, %s349
        %s351 = sadd.s32 %s28, %s30
        %s352 = smul.u32 2, %s351
        %s353 = sadd.s32 %s28, %s30
        %s354 = smul.u32 2, %s353
        %p355 = scmp.lt.s32.totalorder %s28, 0
        %s356 = scalar_select %p355, %s28, 0
        %p357 = scmp.lt.s32.totalorder %s29, 1
        %s358 = scalar_select %p357, %s29, 1
        %s359 = smul.addr %s356, 2
        %s360 = sadd.s32 %s358, %s359
        %s361 = smul.addr %s360, 4
        %s362 = scalar_lea.vmem %s2, %s361
        %p363 = scmp.lt.s32.totalorder %s28, 0
        %s364 = scalar_select %p363, %s28, 0
        %p365 = scmp.lt.s32.totalorder %s29, 1
        %s366 = scalar_select %p365, %s29, 1
        %s367 = smul.addr %s364, 2
        %s368 = sadd.s32 %s366, %s367
        %s369 = smul.addr %s368, 4
        %s370 = scalar_lea.vmem %s3, %s369
        %p371 = scmp.lt.s32.totalorder %s28, 0
        %s372 = scalar_select %p371, %s28, 0
        %p373 = scmp.lt.s32.totalorder %s29, 1
        %s374 = scalar_select %p373, %s29, 1
        %s375 = smul.addr %s372, 2
        %s376 = sadd.s32 %s374, %s375
        %s377 = smul.addr %s376, 4
        %s378 = scalar_lea.vmem %s4, %s377
        %p379 = scmp.lt.s32.totalorder %s28, 0
        %s380 = scalar_select %p379, %s28, 0
        %p381 = scmp.lt.s32.totalorder %s29, 1
        %s382 = scalar_select %p381, %s29, 1
        %s383 = smul.addr %s380, 2
        %s384 = sadd.s32 %s382, %s383
        %s385 = smul.addr %s384, 4
        %s386 = scalar_lea.vmem %s5, %s385
        %p387 = scmp.eq.s32.totalorder %s30, 0
        // Predicated region
        $region37: #{tpu_custom_call.1} parent=27 // pred_check
          %p388 = pneg %p387
        $region38: #{tpu_custom_call.1} parent=27 // pred_check_branch
          %390 = sbr.rel (%p388) target = $region40
        $region39: #{tpu_custom_call.1} parent=27 // pred_region
          %vm391 = vcmask 3072
          %392 = vst.msk [vmem:[%s362] sm:$0xf] %vm391, 0.0
          %393 = vst.msk [vmem:[%s370] sm:$0xf] %vm391, 0.0
          %394 = vst.msk [vmem:[%s378] sm:$0xf] %vm391, 0.0
          %395 = vst.msk [vmem:[%s386] sm:$0xf] %vm391, 0.0
        $region40: #{tpu_custom_call.1} parent=27 // pred_fallthru
          _
        %v396 = vld [vmem:[%s283] sm:$0xff]
        %v397 = vld [vmem:[%s292] sm:$0xf]
        %v398 = vunpack.c.l.bf16 %v397
        %v399 = vand.u32 2147483647, %v396
        %v400 = vsub.f32 0.0, %v399
        %v401 = vmul.f32 %v400, 1.442695
        %v402 = vpow.pop %v401
        %v403 = vadd.f32 %v402, 1.0
        %v404 = vrcp.pop %v403
        %vm405 = vcmp.ge.f32.partialorder %v396, 0.0
        %v406 = vmul.f32 %v402, %v404
        %v407 = vsel %vm405, %v404, %v406
        %v408 = vmax.f32 %v396, 0.0
        %v409 = vmul.f32 %v396, %v398
        %v410 = vsub.f32 %v408, %v409
        %v411 = vadd.f32 %v402, 1.0
        %v412 = vlog2.pop %v411
        %v413 = vmul.f32 %v412, 0.6931472
        %v414 = vmul.f32 -0.5, %v402
        %v415 = vadd.f32 %v414, 1.0
        %v416 = vmul.f32 %v415, %v402
        %v417 = vand.u32 2147483647, %v402
        %vm418 = vcmp.lt.f32.partialorder %v417, 0.0004427343
        %v419 = vsel %vm418, %v416, %v413
        %v420 = vadd.f32 %v410, %v419
        %v421 = vld [vmem:[%s362] sm:$0xf]
        %v422 = vmul.f32 %v407, %v398
        %v424 = vcombine.high %v422, %v422
        %vm426 = vcmask 1043456
        %v427 = vsel %vm426, %v422, 0.0
        %v428 = vsel %vm426, %v424, 0.0
        %v429 = vadd.f32 %v427, %v428
        %430 = vadd.xlane.f32.xlu0 %v429
        %v431 = vpop.xlane.xlu0 %430
        %v432 = vadd.f32 %v421, %v431
        %vm433 = vcmask 3072
        %434 = vst.msk [vmem:[%s362] sm:$0xf] %vm433, %v432
        %v435 = vld [vmem:[%s370] sm:$0xf]
        %v437 = vcombine.high %v407, %v407
        %v439 = vsel %vm426, %v407, 0.0
        %v440 = vsel %vm426, %v437, 0.0
        %v441 = vadd.f32 %v439, %v440
        %442 = vadd.xlane.f32.xlu0 %v441
        %v443 = vpop.xlane.xlu0 %442
        %v444 = vadd.f32 %v435, %v443
        %445 = vst.msk [vmem:[%s370] sm:$0xf] %vm433, %v444
        %v446 = vld [vmem:[%s378] sm:$0xf]
        %v448 = vcombine.high %v398, %v398
        %v450 = vsel %vm426, %v398, 0.0
        %v451 = vsel %vm426, %v448, 0.0
        %v452 = vadd.f32 %v450, %v451
        %453 = vadd.xlane.f32.xlu0 %v452
        %v454 = vpop.xlane.xlu0 %453
        %v455 = vadd.f32 %v446, %v454
        %456 = vst.msk [vmem:[%s378] sm:$0xf] %vm433, %v455
        %v457 = vld [vmem:[%s386] sm:$0xf]
        %v459 = vcombine.high %v420, %v420
        %v461 = vsel %vm426, %v420, 0.0
        %v462 = vsel %vm426, %v459, 0.0
        %v463 = vadd.f32 %v461, %v462
        %464 = vadd.xlane.f32.xlu0 %v463
        %v465 = vpop.xlane.xlu0 %464
        %v466 = vadd.f32 %v457, %v465
        %467 = vst.msk [vmem:[%s386] sm:$0xf] %vm433, %v466
        %p468 = scmp.lt.s32.totalorder %s28, 0
        %s469 = scalar_select %p468, %s28, 0
        %p470 = scmp.lt.s32.totalorder %s29, 1
        %s471 = scalar_select %p470, %s29, 1
        %s472 = smul.addr %s469, 2
        %s473 = sadd.s32 %s471, %s472
        %s474 = smul.addr %s473, 4
        %s475 = scalar_lea.vmem %s2, %s474
        %p476 = scmp.lt.s32.totalorder %s28, 0
        %s477 = scalar_select %p476, %s28, 0
        %p478 = scmp.lt.s32.totalorder %s29, 1
        %s479 = scalar_select %p478, %s29, 1
        %s480 = smul.addr %s477, 2
        %s481 = sadd.s32 %s479, %s480
        %s482 = smul.addr %s481, 4
        %s483 = scalar_lea.vmem %s3, %s482
        %p484 = scmp.lt.s32.totalorder %s28, 0
        %s485 = scalar_select %p484, %s28, 0
        %p486 = scmp.lt.s32.totalorder %s29, 1
        %s487 = scalar_select %p486, %s29, 1
        %s488 = smul.addr %s485, 2
        %s489 = sadd.s32 %s487, %s488
        %s490 = smul.addr %s489, 4
        %s491 = scalar_lea.vmem %s4, %s490
        %p492 = scmp.lt.s32.totalorder %s28, 0
        %s493 = scalar_select %p492, %s28, 0
        %p494 = scmp.lt.s32.totalorder %s29, 1
        %s495 = scalar_select %p494, %s29, 1
        %s496 = smul.addr %s493, 2
        %s497 = sadd.s32 %s495, %s496
        %s498 = smul.addr %s497, 4
        %s499 = scalar_lea.vmem %s5, %s498
        // Predicated region
        $region41: #{tpu_custom_call.1} parent=27 // pred_check
          %p500 = pneg %p122
        $region42: #{tpu_custom_call.1} parent=27 // pred_check_branch
          %502 = sbr.rel (%p500) target = $region44
        $region43: #{tpu_custom_call.1} parent=27 // pred_region
          _
        $region44: #{tpu_custom_call.1} parent=27 // pred_fallthru
          _
        // Predicated region
        $region45: #{tpu_custom_call.1} parent=27 // pred_check
          %p503 = pneg %p150
        $region46: #{tpu_custom_call.1} parent=27 // pred_check_branch
          %505 = sbr.rel (%p503) target = $region48
        $region47: #{tpu_custom_call.1} parent=27 // pred_region
          _
        $region48: #{tpu_custom_call.1} parent=27 // pred_fallthru
          _
        // Predicated region
        $region49: #{tpu_custom_call.1} parent=27 // pred_check
          %p506 = pneg %p178
        $region50: #{tpu_custom_call.1} parent=27 // pred_check_branch
          %508 = sbr.rel (%p506) target = $region52
        $region51: #{tpu_custom_call.1} parent=27 // pred_region
          _
        $region52: #{tpu_custom_call.1} parent=27 // pred_fallthru
          _
        // Predicated region
        $region53: #{tpu_custom_call.1} parent=27 // pred_check
          %p509 = pneg %p206
        $region54: #{tpu_custom_call.1} parent=27 // pred_check_branch
          %511 = sbr.rel (%p509) target = $region56
        $region55: #{tpu_custom_call.1} parent=27 // pred_region
          _
        $region56: #{tpu_custom_call.1} parent=27 // pred_fallthru
          _
      $region28: #{tpu_custom_call.1} parent=5 // pred_fallthru
        _
      %p512 = scmp.le.s32.totalorder 2, %s18
      // Predicated region
      $region57: #{tpu_custom_call.1} parent=5 // pred_check
        %p513 = pneg %p512
      $region58: #{tpu_custom_call.1} parent=5 // pred_check_branch
        %515 = sbr.rel (%p513) target = $region60
      $region59: #{tpu_custom_call.1} parent=5 // pred_region
        %s516 = ssub.s32 %s18, 2
        // Predicated region
        $region61: #{tpu_custom_call.1} parent=59 // pred_check
          %p517 = pneg %p128
        $region62: #{tpu_custom_call.1} parent=59 // pred_check_branch
          %519 = sbr.rel (%p517) target = $region64
        $region63: #{tpu_custom_call.1} parent=59 // pred_region
          %p520 = scmp.lt.s32.totalorder %s31, 0
          %s521 = scalar_select %p520, %s31, 0
          %p522 = scmp.lt.s32.totalorder %s32, 1
          %s523 = scalar_select %p522, %s32, 1
          %s524 = smul.addr %s521, 2
          %s525 = sadd.s32 %s523, %s524
          %s526 = smul.addr %s525, 4
          %s527 = scalar_lea.vmem %s2, %s526
        $region64: #{tpu_custom_call.1} parent=59 // pred_fallthru
          _
        // Predicated region
        $region65: #{tpu_custom_call.1} parent=59 // pred_check
          %p528 = pneg %p156
        $region66: #{tpu_custom_call.1} parent=59 // pred_check_branch
          %530 = sbr.rel (%p528) target = $region68
        $region67: #{tpu_custom_call.1} parent=59 // pred_region
          %p531 = scmp.lt.s32.totalorder %s31, 0
          %s532 = scalar_select %p531, %s31, 0
          %p533 = scmp.lt.s32.totalorder %s32, 1
          %s534 = scalar_select %p533, %s32, 1
          %s535 = smul.addr %s532, 2
          %s536 = sadd.s32 %s534, %s535
          %s537 = smul.addr %s536, 4
          %s538 = scalar_lea.vmem %s3, %s537
        $region68: #{tpu_custom_call.1} parent=59 // pred_fallthru
          _
        // Predicated region
        $region69: #{tpu_custom_call.1} parent=59 // pred_check
          %p539 = pneg %p184
        $region70: #{tpu_custom_call.1} parent=59 // pred_check_branch
          %541 = sbr.rel (%p539) target = $region72
        $region71: #{tpu_custom_call.1} parent=59 // pred_region
          %p542 = scmp.lt.s32.totalorder %s31, 0
          %s543 = scalar_select %p542, %s31, 0
          %p544 = scmp.lt.s32.totalorder %s32, 1
          %s545 = scalar_select %p544, %s32, 1
          %s546 = smul.addr %s543, 2
          %s547 = sadd.s32 %s545, %s546
          %s548 = smul.addr %s547, 4
          %s549 = scalar_lea.vmem %s4, %s548
        $region72: #{tpu_custom_call.1} parent=59 // pred_fallthru
          _
        // Predicated region
        $region73: #{tpu_custom_call.1} parent=59 // pred_check
          %p550 = pneg %p212
        $region74: #{tpu_custom_call.1} parent=59 // pred_check_branch
          %552 = sbr.rel (%p550) target = $region76
        $region75: #{tpu_custom_call.1} parent=59 // pred_region
          %p553 = scmp.lt.s32.totalorder %s31, 0
          %s554 = scalar_select %p553, %s31, 0
          %p555 = scmp.lt.s32.totalorder %s32, 1
          %s556 = scalar_select %p555, %s32, 1
          %s557 = smul.addr %s554, 2
          %s558 = sadd.s32 %s556, %s557
          %s559 = smul.addr %s558, 4
          %s560 = scalar_lea.vmem %s5, %s559
        $region76: #{tpu_custom_call.1} parent=59 // pred_fallthru
          _
      $region60: #{tpu_custom_call.1} parent=5 // pred_fallthru
        _
    $region6: #{tpu_custom_call.1} parent=1 // loop_footer
      %s22 = sadd.s32 1, %s18
    $region7: #{tpu_custom_call.1} parent=1 // loop_footer_branch
      %17 = sbr.rel target = $region3
    $region8: #{tpu_custom_call.1} parent=1 // loop_exit
      _
    %561 = vsyncpa [#allocation3], 1
    %s562 = scalar_lea.sflag [#allocation3], 1
    %563 = vsyncpa %s562, 1
    %564 = vsyncpa [#allocation5], 1
    %s565 = scalar_lea.sflag [#allocation5], 1
    %566 = vsyncpa %s565, 1

</llo_original>
